<compile_context>
chip_gen: v6e
topology: v6e:2x2x1
jax: 0.10.0
libtpu: 0.0.40
codegen_flags: <defaults>
</compile_context>

<pallas_src>
import functools

import jax
import jax.numpy as jnp
from jax.experimental import pallas as pl
from jax.experimental.pallas import tpu as pltpu


# ----------------------------------------------------------------------------
# Kernel
# ----------------------------------------------------------------------------
def _cross_attn_kernel(img_ref, phr_ref, wqo_ref, wkv_ref, b4_ref, out_ref,
                       *, num_heads):
    tB, D = img_ref.shape                     # batch tile, feature dim
    N = phr_ref.shape[0]                      # tB * K phrase rows
    K = N // tB
    H = num_heads
    hd = D // H
    scale = 1.0 / float(hd) ** 0.5
    f32 = jnp.float32
    cdtype = wqo_ref.dtype                    # MXU input dtype (f32 or bf16)

    img = img_ref[...].astype(cdtype)         # (tB, D)
    phr = phr_ref[...].astype(cdtype)         # (N, D)  already flattened
    wq = wqo_ref[0:D, :]                      # (D, D)  sublane slab of packed w
    wo = wqo_ref[D:2 * D, :]                  # (D, D)
    bq = b4_ref[0:1, :]
    bk = b4_ref[1:2, :]
    bv = b4_ref[2:3, :]
    bo = b4_ref[3:4, :]

    # In-projections: q from the image token, packed k|v from the phrases in a
    # single MXU pass with a lane-dense 2D-wide output; f32 accumulation.
    qp = jnp.dot(img, wq, preferred_element_type=f32) + bq            # (tB, D)
    kvp = jnp.dot(phr, wkv_ref[...], preferred_element_type=f32)      # (N, 2D)
    kp3 = (kvp[:, :D] + bk).reshape(tB, K, D)                         # (tB, K, D)
    vp3 = (kvp[:, D:] + bv).reshape(tB, K, D)                         # (tB, K, D)

    # Per-head attention core.  H is small and static, so this Python loop is
    # unrolled at trace time; all work here is VPU/XLU/EUP (no H-contraction
    # matmul competing for the MXU result path, no head masks rebuilt per grid
    # step, no (tB,K,D) broadcast intermediates).
    ctx_parts = []
    for h in range(H):
        lo = h * hd
        q_h = qp[:, None, lo:lo + hd]                                 # (tB, 1, hd)
        k_h = kp3[:, :, lo:lo + hd]                                   # (tB, K, hd)
        v_h = vp3[:, :, lo:lo + hd]                                   # (tB, K, hd)
        s_h = jnp.sum(q_h * k_h, axis=-1, keepdims=True) * scale      # (tB, K, 1)
        s_h = s_h - jnp.max(s_h, axis=1, keepdims=True)
        e_h = jnp.exp(s_h)
        a_h = e_h / jnp.sum(e_h, axis=1, keepdims=True)               # softmax over K
        ctx_parts.append(jnp.sum(a_h * v_h, axis=1))                  # (tB, hd)
    ctx = jnp.concatenate(ctx_parts, axis=-1)                         # (tB, D)

    # Output projection + L2 normalisation.
    # F.normalize: x / max(||x||, 1e-12)  ==  x * rsqrt(max(||x||^2, 1e-24))
    fused = jnp.dot(ctx.astype(cdtype), wo, preferred_element_type=f32) + bo
    ssq = jnp.sum(fused * fused, axis=-1, keepdims=True)
    out_ref[...] = fused * jax.lax.rsqrt(jnp.maximum(ssq, 1e-24))


# ----------------------------------------------------------------------------
# VMEM budgeting / tiling
# ----------------------------------------------------------------------------
def _vmem_caps():
    """(explicit scoped-VMEM limit, planning budget for the tile picker)."""
    try:
        info = pltpu.get_tpu_info()
        cap = int(getattr(info, "vmem_capacity_bytes", 0)) or (64 << 20)
    except Exception:                      # query unavailable: assume v7x 64 MiB / core
        cap = 64 << 20
    limit = cap * 3 // 4                   # headroom for compiler-internal scratch
    budget = limit * 4 // 5                # extra margin for the analytic estimate below
    return limit, budget


def _tile_vmem_bytes(tile_b, K, D, w_bytes):
    """Estimated VMEM for one batch tile: pipelined I/O + resident weights +
    live in-kernel intermediates (kvp is 2D wide; kp/vp are K rows each)."""
    row = 4 * D                                        # one f32 feature row
    io = 2 * tile_b * row * (K + 2)                    # img + phr + out, double-buffered
    weights = 4 * D * D * w_bytes + 4 * row            # wqo + wkv (single copy) + biases
    inter = tile_b * row * (5 * K + 6)                 # kvp/kp/vp + per-head temps + q/ctx/fused
    return io + weights + inter


def _pick_tile_b(B, K, D, w_bytes, budget):
    # Candidate tiles: multiples of 8 that divide B, strictly smaller than B so
    # the parallel grid axis has >= 2 steps (both v7x TensorCores get work).
    cands = [t for t in range(8, B, 8) if B % t == 0]
    fits = [t for t in cands if _tile_vmem_bytes(t, K, D, w_bytes) <= budget]
    if fits:
        return max(fits)
    if cands:
        return min(cands)      # nothing fits the budget: take the smallest tile
    return B                   # tiny / non-multiple-of-8 batches: one full-array tile


def _resident_spec(shape):
    """BlockSpec for a constant-index (resident) operand; single-buffered when
    the installed BlockSpec supports pipeline_mode (saves VMEM at large D)."""
    index_map = lambda i: (0,) * len(shape)
    try:
        return pl.BlockSpec(shape, index_map, pipeline_mode=pl.Buffered(1))
    except TypeError:
        return pl.BlockSpec(shape, index_map)


# ----------------------------------------------------------------------------
# Wrapper
# ----------------------------------------------------------------------------
def pack_params(params, compute_dtype=jnp.float32):
    """Pack the 8 MultiheadAttention tensors ONCE (outside the hot path) into
    3 slabs: wq|wo stacked on sublanes, wk|wv concatenated on lanes, 4 biases
    stacked.  Weight slabs are stored in `compute_dtype` (bf16 at production D)."""
    wq, wk, wv, wo, bq, bk, bv, bo = params            # PyTorch convention: W is (out, in)
    wqo = jnp.concatenate([wq.T, wo.T], axis=0).astype(compute_dtype)   # (2D, D)
    wkv = jnp.concatenate([wk.T, wv.T], axis=1).astype(compute_dtype)   # (D, 2D)
    b4 = jnp.stack([bq, bk, bv, bo], axis=0).astype(jnp.float32)        # (4, D)
    return wqo, wkv, b4


def phrase_cross_aggregator(img_emb, phr_emb, packed_params, num_heads):
    """img_emb: (B, D) f32; phr_emb: (B, K, D) f32; packed_params from
    pack_params().  Returns the fused, L2-normalised embedding (B, D) f32."""
    B, D = img_emb.shape
    _, K, _ = phr_emb.shape
    assert D % num_heads == 0

    wqo, wkv, b4 = packed_params
    w_bytes = jnp.dtype(wqo.dtype).itemsize

    vmem_limit, vmem_budget = _vmem_caps()
    tile_b = _pick_tile_b(B, K, D, w_bytes, vmem_budget)
    nb = B // tile_b
    phr2 = phr_emb.reshape(B * K, D)                   # flatten in the wrapper

    kern = functools.partial(_cross_attn_kernel, num_heads=num_heads)

    cost = pl.CostEstimate(
        flops=2 * B * D * D * (2 + 2 * K) + 6 * B * K * D,
        transcendentals=B * K * num_heads,
        bytes_accessed=4 * (2 * B * D + B * K * D + 4 * D) + 4 * D * D * w_bytes,
    )

    return pl.pallas_call(
        kern,
        out_shape=jax.ShapeDtypeStruct((B, D), jnp.float32),
        grid_spec=pltpu.PrefetchScalarGridSpec(
            num_scalar_prefetch=0,
            grid=(nb,),
            in_specs=[
                pl.BlockSpec((tile_b, D), lambda i: (i, 0)),        # img tile
                pl.BlockSpec((tile_b * K, D), lambda i: (i, 0)),    # phrase tile
                _resident_spec((2 * D, D)),                         # wq|wo (resident)
                _resident_spec((D, 2 * D)),                         # wk|wv (resident)
                _resident_spec((4, D)),                             # biases (resident)
            ],
            out_specs=pl.BlockSpec((tile_b, D), lambda i: (i, 0)),
        ),
        compiler_params=pltpu.CompilerParams(
            dimension_semantics=("parallel",),
            vmem_limit_bytes=vmem_limit,
        ),
        cost_estimate=cost,
    )(img_emb, phr2, wqo, wkv, b4)


# ----------------------------------------------------------------------------
# Synthetic params + pure-JAX reference (nn.MultiheadAttention, batch_first)
# ----------------------------------------------------------------------------
def make_params(key, dim):
    k1, k2, k3 = jax.random.split(key, 3)
    bound_in = 1.0 / jnp.sqrt(jnp.float32(dim))
    in_proj_w = jax.random.uniform(k1, (3 * dim, dim), jnp.float32,
                                   -bound_in, bound_in)
    in_proj_b = jax.random.uniform(k2, (3 * dim,), jnp.float32,
                                   -bound_in, bound_in)
    out_w = jax.random.uniform(k3, (dim, dim), jnp.float32, -bound_in, bound_in)
    out_b = jnp.zeros((dim,), jnp.float32)
    wq, wk, wv = in_proj_w[:dim], in_proj_w[dim:2 * dim], in_proj_w[2 * dim:]
    bq, bk, bv = in_proj_b[:dim], in_proj_b[dim:2 * dim], in_proj_b[2 * dim:]
    return (wq, wk, wv, out_w, bq, bk, bv, out_b)


def reference(img_emb, phr_emb, params, num_heads):
    wq, wk, wv, wo, bq, bk, bv, bo = params
    B, K, D = phr_emb.shape
    H = num_heads
    hd = D // H
    q = (img_emb @ wq.T + bq).reshape(B, 1, H, hd)
    k = (phr_emb.reshape(B * K, D) @ wk.T + bk).reshape(B, K, H, hd)
    v = (phr_emb.reshape(B * K, D) @ wv.T + bv).reshape(B, K, H, hd)
    s = jnp.einsum('bqhd,bkhd->bhqk', q, k) / jnp.sqrt(jnp.float32(hd))
    a = jax.nn.softmax(s, axis=-1)
    ctx = jnp.einsum('bhqk,bkhd->bqhd', a, v).reshape(B, D)
    fused = ctx @ wo.T + bo
    nrm = jnp.sqrt(jnp.sum(fused * fused, axis=-1, keepdims=True))
    return fused / jnp.maximum(nrm, 1e-12)


if __name__ == "__main__":
    key = jax.random.PRNGKey(0)
    # Configs: single full tile (B=2), multi-tile parallel grids (B=16 -> 2
    # tiles, B=32 -> 2 tiles), and a batch not divisible by 8 (fallback path).
    for (B, K, D, H) in ((2, 8, 32, 4), (16, 8, 32, 4), (32, 8, 32, 4),
                         (12, 8, 32, 4)):
        k_img, k_phr, k_par = jax.random.split(jax.random.fold_in(key, B), 3)
        img_emb = jax.random.normal(k_img, (B, D), jnp.float32)
        phr_emb = jax.random.normal(k_phr, (B, K, D), jnp.float32)
        params = make_params(k_par, D)

        # Pre-pack once, outside the hot path.  bf16 MXU inputs are the
        # production-size (D >= 512) lever; f32 here for the tight tolerance.
        compute_dtype = jnp.bfloat16 if D >= 512 else jnp.float32
        packed = pack_params(params, compute_dtype)

        out = phrase_cross_aggregator(img_emb, phr_emb, packed, H)
        out = jax.block_until_ready(out)

        ref = reference(img_emb, phr_emb, params, H)
        assert out.shape == (B, D)
        assert jnp.allclose(out, ref, rtol=1e-4, atol=1e-5), (B, out, ref)

    print("KERNEL_OK")
</pallas_src>

<mosaic_0001>
module attributes {stable_mosaic.version = 11 : i64} {
  func.func @_cross_attn_kernel(%arg0: i32, %arg1: memref<2x32xf32, #tpu.memory_space<vmem>>, %arg2: memref<16x32xf32, #tpu.memory_space<vmem>>, %arg3: memref<64x32xf32, #tpu.memory_space<vmem>>, %arg4: memref<32x64xf32, #tpu.memory_space<vmem>>, %arg5: memref<4x32xf32, #tpu.memory_space<vmem>>, %arg6: memref<2x32xf32, #tpu.memory_space<vmem>>) attributes {dimension_semantics = [#tpu.dimension_semantics<parallel>], iteration_bounds = array<i64: 1>, scalar_prefetch = 0 : i64, scratch_operands = 0 : i64, tpu.core_type = #tpu.core_type<tc>, window_params = [{transform_indices = @transform_0, window_bounds = array<i64: 2, 32>}, {transform_indices = @transform_1, window_bounds = array<i64: 16, 32>}, {pipeline_mode = #tpu.pipeline_mode<synchronous>, transform_indices = @transform_2, window_bounds = array<i64: 64, 32>}, {pipeline_mode = #tpu.pipeline_mode<synchronous>, transform_indices = @transform_3, window_bounds = array<i64: 32, 64>}, {pipeline_mode = #tpu.pipeline_mode<synchronous>, transform_indices = @transform_4, window_bounds = array<i64: 4, 32>}, {transform_indices = @transform_5, window_bounds = array<i64: 2, 32>}]} {
    %c0 = arith.constant 0 : index
    %c0_0 = arith.constant 0 : index
    %0 = vector.load %arg1[%c0, %c0_0] : memref<2x32xf32, #tpu.memory_space<vmem>>, vector<2x32xf32>
    %c0_1 = arith.constant 0 : index
    %c0_2 = arith.constant 0 : index
    %1 = vector.load %arg2[%c0_1, %c0_2] : memref<16x32xf32, #tpu.memory_space<vmem>>, vector<16x32xf32>
    %c0_3 = arith.constant 0 : index
    %c0_4 = arith.constant 0 : index
    %2 = vector.load %arg3[%c0_3, %c0_4] : memref<64x32xf32, #tpu.memory_space<vmem>>, vector<32x32xf32>
    %c32 = arith.constant 32 : index
    %c0_5 = arith.constant 0 : index
    %3 = vector.load %arg3[%c32, %c0_5] : memref<64x32xf32, #tpu.memory_space<vmem>>, vector<32x32xf32>
    %c0_6 = arith.constant 0 : index
    %c0_7 = arith.constant 0 : index
    %4 = vector.load %arg5[%c0_6, %c0_7] : memref<4x32xf32, #tpu.memory_space<vmem>>, vector<1x32xf32>
    %c1 = arith.constant 1 : index
    %c0_8 = arith.constant 0 : index
    %5 = vector.load %arg5[%c1, %c0_8] : memref<4x32xf32, #tpu.memory_space<vmem>>, vector<1x32xf32>
    %c2 = arith.constant 2 : index
    %c0_9 = arith.constant 0 : index
    %6 = vector.load %arg5[%c2, %c0_9] : memref<4x32xf32, #tpu.memory_space<vmem>>, vector<1x32xf32>
    %c3 = arith.constant 3 : index
    %c0_10 = arith.constant 0 : index
    %7 = vector.load %arg5[%c3, %c0_10] : memref<4x32xf32, #tpu.memory_space<vmem>>, vector<1x32xf32>
    %cst = arith.constant dense<0.000000e+00> : vector<2x32xf32>
    %8 = tpu.matmul %0, %2, %cst {dimension_numbers = #tpu.dot_dimension_numbers<[1], [0], [0], [1], [0, 0, 1, 1], [], []>} : vector<2x32xf32>, vector<32x32xf32>, vector<2x32xf32> -> vector<2x32xf32>
    %9 = vector.broadcast %4 : vector<1x32xf32> to vector<2x32xf32>
    %10 = arith.addf %8, %9 : vector<2x32xf32>
    %c0_11 = arith.constant 0 : index
    %c0_12 = arith.constant 0 : index
    %11 = vector.load %arg4[%c0_11, %c0_12] : memref<32x64xf32, #tpu.memory_space<vmem>>, vector<32x64xf32>
    %cst_13 = arith.constant dense<0.000000e+00> : vector<16x64xf32>
    %12 = tpu.matmul %1, %11, %cst_13 {dimension_numbers = #tpu.dot_dimension_numbers<[1], [0], [0], [1], [0, 0, 1, 1], [], []>} : vector<16x32xf32>, vector<32x64xf32>, vector<16x64xf32> -> vector<16x64xf32>
    %13 = vector.extract_strided_slice %12 {offsets = [0, 0], sizes = [16, 32], strides = [1, 1]} : vector<16x64xf32> to vector<16x32xf32>
    %14 = vector.broadcast %5 : vector<1x32xf32> to vector<16x32xf32>
    %15 = arith.addf %13, %14 : vector<16x32xf32>
    %16 = vector.shape_cast %15 : vector<16x32xf32> to vector<2x8x32xf32>
    %17 = vector.extract_strided_slice %12 {offsets = [0, 32], sizes = [16, 32], strides = [1, 1]} : vector<16x64xf32> to vector<16x32xf32>
    %18 = vector.broadcast %6 : vector<1x32xf32> to vector<16x32xf32>
    %19 = arith.addf %17, %18 : vector<16x32xf32>
    %20 = vector.shape_cast %19 : vector<16x32xf32> to vector<2x8x32xf32>
    %21 = vector.extract_strided_slice %10 {offsets = [0, 0], sizes = [2, 8], strides = [1, 1]} : vector<2x32xf32> to vector<2x8xf32>
    %22 = vector.shape_cast %21 : vector<2x8xf32> to vector<2x1x8xf32>
    %23 = vector.extract_strided_slice %16 {offsets = [0, 0, 0], sizes = [2, 8, 8], strides = [1, 1, 1]} : vector<2x8x32xf32> to vector<2x8x8xf32>
    %24 = vector.extract_strided_slice %20 {offsets = [0, 0, 0], sizes = [2, 8, 8], strides = [1, 1, 1]} : vector<2x8x32xf32> to vector<2x8x8xf32>
    %25 = vector.broadcast %22 : vector<2x1x8xf32> to vector<2x8x8xf32>
    %26 = arith.mulf %25, %23 : vector<2x8x8xf32>
    %cst_14 = arith.constant dense<0.000000e+00> : vector<2x8xf32>
    %27 = vector.multi_reduction <add>, %26, %cst_14 [2] : vector<2x8x8xf32> to vector<2x8xf32>
    %28 = vector.shape_cast %27 : vector<2x8xf32> to vector<2x8x1xf32>
    %cst_15 = arith.constant 0.353553385 : f32
    %29 = vector.broadcast %cst_15 : f32 to vector<2x8x1xf32>
    %30 = arith.mulf %28, %29 : vector<2x8x1xf32>
    %cst_16 = arith.constant dense<0xFF800000> : vector<2x1xf32>
    %31 = vector.multi_reduction <maximumf>, %30, %cst_16 [1] : vector<2x8x1xf32> to vector<2x1xf32>
    %32 = vector.shape_cast %31 : vector<2x1xf32> to vector<2x1x1xf32>
    %33 = vector.broadcast %32 : vector<2x1x1xf32> to vector<2x8x1xf32>
    %34 = arith.subf %30, %33 : vector<2x8x1xf32>
    %35 = math.exp %34 : vector<2x8x1xf32>
    %cst_17 = arith.constant dense<0.000000e+00> : vector<2x1xf32>
    %36 = vector.multi_reduction <add>, %35, %cst_17 [1] : vector<2x8x1xf32> to vector<2x1xf32>
    %37 = vector.shape_cast %36 : vector<2x1xf32> to vector<2x1x1xf32>
    %38 = vector.broadcast %37 : vector<2x1x1xf32> to vector<2x8x1xf32>
    %39 = arith.divf %35, %38 : vector<2x8x1xf32>
    %40 = vector.broadcast %39 : vector<2x8x1xf32> to vector<2x8x8xf32>
    %41 = arith.mulf %40, %24 : vector<2x8x8xf32>
    %cst_18 = arith.constant dense<0.000000e+00> : vector<2x8xf32>
    %42 = vector.multi_reduction <add>, %41, %cst_18 [1] : vector<2x8x8xf32> to vector<2x8xf32>
    %43 = vector.extract_strided_slice %10 {offsets = [0, 8], sizes = [2, 8], strides = [1, 1]} : vector<2x32xf32> to vector<2x8xf32>
    %44 = vector.shape_cast %43 : vector<2x8xf32> to vector<2x1x8xf32>
    %45 = vector.extract_strided_slice %16 {offsets = [0, 0, 8], sizes = [2, 8, 8], strides = [1, 1, 1]} : vector<2x8x32xf32> to vector<2x8x8xf32>
    %46 = vector.extract_strided_slice %20 {offsets = [0, 0, 8], sizes = [2, 8, 8], strides = [1, 1, 1]} : vector<2x8x32xf32> to vector<2x8x8xf32>
    %47 = vector.broadcast %44 : vector<2x1x8xf32> to vector<2x8x8xf32>
    %48 = arith.mulf %47, %45 : vector<2x8x8xf32>
    %cst_19 = arith.constant dense<0.000000e+00> : vector<2x8xf32>
    %49 = vector.multi_reduction <add>, %48, %cst_19 [2] : vector<2x8x8xf32> to vector<2x8xf32>
    %50 = vector.shape_cast %49 : vector<2x8xf32> to vector<2x8x1xf32>
    %cst_20 = arith.constant 0.353553385 : f32
    %51 = vector.broadcast %cst_20 : f32 to vector<2x8x1xf32>
    %52 = arith.mulf %50, %51 : vector<2x8x1xf32>
    %cst_21 = arith.constant dense<0xFF800000> : vector<2x1xf32>
    %53 = vector.multi_reduction <maximumf>, %52, %cst_21 [1] : vector<2x8x1xf32> to vector<2x1xf32>
    %54 = vector.shape_cast %53 : vector<2x1xf32> to vector<2x1x1xf32>
    %55 = vector.broadcast %54 : vector<2x1x1xf32> to vector<2x8x1xf32>
    %56 = arith.subf %52, %55 : vector<2x8x1xf32>
    %57 = math.exp %56 : vector<2x8x1xf32>
    %cst_22 = arith.constant dense<0.000000e+00> : vector<2x1xf32>
    %58 = vector.multi_reduction <add>, %57, %cst_22 [1] : vector<2x8x1xf32> to vector<2x1xf32>
    %59 = vector.shape_cast %58 : vector<2x1xf32> to vector<2x1x1xf32>
    %60 = vector.broadcast %59 : vector<2x1x1xf32> to vector<2x8x1xf32>
    %61 = arith.divf %57, %60 : vector<2x8x1xf32>
    %62 = vector.broadcast %61 : vector<2x8x1xf32> to vector<2x8x8xf32>
    %63 = arith.mulf %62, %46 : vector<2x8x8xf32>
    %cst_23 = arith.constant dense<0.000000e+00> : vector<2x8xf32>
    %64 = vector.multi_reduction <add>, %63, %cst_23 [1] : vector<2x8x8xf32> to vector<2x8xf32>
    %65 = vector.extract_strided_slice %10 {offsets = [0, 16], sizes = [2, 8], strides = [1, 1]} : vector<2x32xf32> to vector<2x8xf32>
    %66 = vector.shape_cast %65 : vector<2x8xf32> to vector<2x1x8xf32>
    %67 = vector.extract_strided_slice %16 {offsets = [0, 0, 16], sizes = [2, 8, 8], strides = [1, 1, 1]} : vector<2x8x32xf32> to vector<2x8x8xf32>
    %68 = vector.extract_strided_slice %20 {offsets = [0, 0, 16], sizes = [2, 8, 8], strides = [1, 1, 1]} : vector<2x8x32xf32> to vector<2x8x8xf32>
    %69 = vector.broadcast %66 : vector<2x1x8xf32> to vector<2x8x8xf32>
    %70 = arith.mulf %69, %67 : vector<2x8x8xf32>
    %cst_24 = arith.constant dense<0.000000e+00> : vector<2x8xf32>
    %71 = vector.multi_reduction <add>, %70, %cst_24 [2] : vector<2x8x8xf32> to vector<2x8xf32>
    %72 = vector.shape_cast %71 : vector<2x8xf32> to vector<2x8x1xf32>
    %cst_25 = arith.constant 0.353553385 : f32
    %73 = vector.broadcast %cst_25 : f32 to vector<2x8x1xf32>
    %74 = arith.mulf %72, %73 : vector<2x8x1xf32>
    %cst_26 = arith.constant dense<0xFF800000> : vector<2x1xf32>
    %75 = vector.multi_reduction <maximumf>, %74, %cst_26 [1] : vector<2x8x1xf32> to vector<2x1xf32>
    %76 = vector.shape_cast %75 : vector<2x1xf32> to vector<2x1x1xf32>
    %77 = vector.broadcast %76 : vector<2x1x1xf32> to vector<2x8x1xf32>
    %78 = arith.subf %74, %77 : vector<2x8x1xf32>
    %79 = math.exp %78 : vector<2x8x1xf32>
    %cst_27 = arith.constant dense<0.000000e+00> : vector<2x1xf32>
    %80 = vector.multi_reduction <add>, %79, %cst_27 [1] : vector<2x8x1xf32> to vector<2x1xf32>
    %81 = vector.shape_cast %80 : vector<2x1xf32> to vector<2x1x1xf32>
    %82 = vector.broadcast %81 : vector<2x1x1xf32> to vector<2x8x1xf32>
    %83 = arith.divf %79, %82 : vector<2x8x1xf32>
    %84 = vector.broadcast %83 : vector<2x8x1xf32> to vector<2x8x8xf32>
    %85 = arith.mulf %84, %68 : vector<2x8x8xf32>
    %cst_28 = arith.constant dense<0.000000e+00> : vector<2x8xf32>
    %86 = vector.multi_reduction <add>, %85, %cst_28 [1] : vector<2x8x8xf32> to vector<2x8xf32>
    %87 = vector.extract_strided_slice %10 {offsets = [0, 24], sizes = [2, 8], strides = [1, 1]} : vector<2x32xf32> to vector<2x8xf32>
    %88 = vector.shape_cast %87 : vector<2x8xf32> to vector<2x1x8xf32>
    %89 = vector.extract_strided_slice %16 {offsets = [0, 0, 24], sizes = [2, 8, 8], strides = [1, 1, 1]} : vector<2x8x32xf32> to vector<2x8x8xf32>
    %90 = vector.extract_strided_slice %20 {offsets = [0, 0, 24], sizes = [2, 8, 8], strides = [1, 1, 1]} : vector<2x8x32xf32> to vector<2x8x8xf32>
    %91 = vector.broadcast %88 : vector<2x1x8xf32> to vector<2x8x8xf32>
    %92 = arith.mulf %91, %89 : vector<2x8x8xf32>
    %cst_29 = arith.constant dense<0.000000e+00> : vector<2x8xf32>
    %93 = vector.multi_reduction <add>, %92, %cst_29 [2] : vector<2x8x8xf32> to vector<2x8xf32>
    %94 = vector.shape_cast %93 : vector<2x8xf32> to vector<2x8x1xf32>
    %cst_30 = arith.constant 0.353553385 : f32
    %95 = vector.broadcast %cst_30 : f32 to vector<2x8x1xf32>
    %96 = arith.mulf %94, %95 : vector<2x8x1xf32>
    %cst_31 = arith.constant dense<0xFF800000> : vector<2x1xf32>
    %97 = vector.multi_reduction <maximumf>, %96, %cst_31 [1] : vector<2x8x1xf32> to vector<2x1xf32>
    %98 = vector.shape_cast %97 : vector<2x1xf32> to vector<2x1x1xf32>
    %99 = vector.broadcast %98 : vector<2x1x1xf32> to vector<2x8x1xf32>
    %100 = arith.subf %96, %99 : vector<2x8x1xf32>
    %101 = math.exp %100 : vector<2x8x1xf32>
    %cst_32 = arith.constant dense<0.000000e+00> : vector<2x1xf32>
    %102 = vector.multi_reduction <add>, %101, %cst_32 [1] : vector<2x8x1xf32> to vector<2x1xf32>
    %103 = vector.shape_cast %102 : vector<2x1xf32> to vector<2x1x1xf32>
    %104 = vector.broadcast %103 : vector<2x1x1xf32> to vector<2x8x1xf32>
    %105 = arith.divf %101, %104 : vector<2x8x1xf32>
    %106 = vector.broadcast %105 : vector<2x8x1xf32> to vector<2x8x8xf32>
    %107 = arith.mulf %106, %90 : vector<2x8x8xf32>
    %cst_33 = arith.constant dense<0.000000e+00> : vector<2x8xf32>
    %108 = vector.multi_reduction <add>, %107, %cst_33 [1] : vector<2x8x8xf32> to vector<2x8xf32>
    %109 = tpu.concatenate %42, %64, %86, %108 in 1 : vector<2x8xf32>, vector<2x8xf32>, vector<2x8xf32>, vector<2x8xf32> -> vector<2x32xf32>
    %cst_34 = arith.constant dense<0.000000e+00> : vector<2x32xf32>
    %110 = tpu.matmul %109, %3, %cst_34 {dimension_numbers = #tpu.dot_dimension_numbers<[1], [0], [0], [1], [0, 0, 1, 1], [], []>} : vector<2x32xf32>, vector<32x32xf32>, vector<2x32xf32> -> vector<2x32xf32>
    %111 = vector.broadcast %7 : vector<1x32xf32> to vector<2x32xf32>
    %112 = arith.addf %110, %111 : vector<2x32xf32>
    %113 = arith.mulf %112, %112 : vector<2x32xf32>
    %cst_35 = arith.constant dense<0.000000e+00> : vector<2xf32>
    %114 = vector.multi_reduction <add>, %113, %cst_35 [1] : vector<2x32xf32> to vector<2xf32>
    %115 = vector.shape_cast %114 : vector<2xf32> to vector<2x1xf32>
    %cst_36 = arith.constant 1.000000e-24 : f32
    %116 = vector.broadcast %cst_36 : f32 to vector<2x1xf32>
    %117 = arith.maximumf %115, %116 : vector<2x1xf32>
    %118 = math.rsqrt %117 : vector<2x1xf32>
    %119 = vector.broadcast %118 : vector<2x1xf32> to vector<2x32xf32>
    %120 = arith.mulf %112, %119 : vector<2x32xf32>
    %c0_37 = arith.constant 0 : index
    %c0_38 = arith.constant 0 : index
    %121 = vector.load %arg6[%c0_37, %c0_38] : memref<2x32xf32, #tpu.memory_space<vmem>>, vector<2x32xf32>
    tpu.vector_store %arg6[%c0_37, %c0_38], %120 {strides = array<i32>} : memref<2x32xf32, #tpu.memory_space<vmem>>, vector<2x32xf32>,
    return
  }
  func.func @transform_0(%arg0: i32) -> (i32, i32) {
    %c0_i32 = arith.constant 0 : i32
    %c0_i32_0 = arith.constant 0 : i32
    return %arg0, %c0_i32 : i32, i32
  }
  func.func @transform_1(%arg0: i32) -> (i32, i32) {
    %c0_i32 = arith.constant 0 : i32
    %c0_i32_0 = arith.constant 0 : i32
    return %arg0, %c0_i32 : i32, i32
  }
  func.func @transform_2(%arg0: i32) -> (i32, i32) {
    %c0_i32 = arith.constant 0 : i32
    %c0_i32_0 = arith.constant 0 : i32
    %c0_i32_1 = arith.constant 0 : i32
    return %c0_i32, %c0_i32_0 : i32, i32
  }
  func.func @transform_3(%arg0: i32) -> (i32, i32) {
    %c0_i32 = arith.constant 0 : i32
    %c0_i32_0 = arith.constant 0 : i32
    %c0_i32_1 = arith.constant 0 : i32
    return %c0_i32, %c0_i32_0 : i32, i32
  }
  func.func @transform_4(%arg0: i32) -> (i32, i32) {
    %c0_i32 = arith.constant 0 : i32
    %c0_i32_0 = arith.constant 0 : i32
    %c0_i32_1 = arith.constant 0 : i32
    return %c0_i32, %c0_i32_0 : i32, i32
  }
  func.func @transform_5(%arg0: i32) -> (i32, i32) {
    %c0_i32 = arith.constant 0 : i32
    %c0_i32_0 = arith.constant 0 : i32
    return %arg0, %c0_i32 : i32, i32
  }
}

</mosaic_0001>

<llo_original>
// kernel: tpu_custom_call.1
$region0: #{tpu_custom_call.1}
  #allocation0 [shape = 'u32[]', space=smem, size = 0x4, offset = 0x4, fixed_abs, tag = 'smem constant byte address 0x4 - core index']
  #allocation1 [shape = 'u32[144,128]{1,0:T(1,128)}', space=vmem, size = 0x12000, scoped, tag = 'internal scratch']
  %s0 = inlined_call_operand.vmem [shape: f32[2,32], index: 0, kind: input, shape index: {}]
  %s1 = inlined_call_operand.vmem [shape: f32[16,32], index: 1, kind: input, shape index: {}]
  %s2 = inlined_call_operand.vmem [shape: f32[64,32], index: 2, kind: input, shape index: {}]
  %s3 = inlined_call_operand.vmem [shape: f32[32,64], index: 3, kind: input, shape index: {}]
  %s4 = inlined_call_operand.vmem [shape: f32[4,32], index: 4, kind: input, shape index: {}]
  %s5 = inlined_call_operand.hbm [shape: f32[2,32], index: 5, kind: output, shape index: {}]
  %s6 = sld [smem:[#allocation0]]
  $region30: #{tpu_custom_call.1} parent=0
    _
  %s8 = ssub.s32 1, %s6
  %s9 = scalar_select 0, %s8, %s6
  $region1: #{tpu_custom_call.1} parent=0
    #allocation2 [shape = 'u8[1024]{0}', space=vmem, size = 0x400, scoped, tag = 'output window, operand 0, single buffered']
    #allocation3 [shape = 's32[1]{0}', space=sflag, size = 0x4, scoped, tag = 'scoped memory for tpu_custom_call.1']
    %10 = vsyncpa [#allocation3], 0
    // Predicated region
    $region2: #{tpu_custom_call.1} parent=1 // pred_check
      _
    $region3: #{tpu_custom_call.1} parent=1 // pred_check_branch
      %12 = sbr.rel (0) target = $region5
    $region4: #{tpu_custom_call.1} parent=1 // pred_region
      _
    $region5: #{tpu_custom_call.1} parent=1 // pred_fallthru
      _
    // Predicated region
    $region6: #{tpu_custom_call.1} parent=1 // pred_check
      _
    $region7: #{tpu_custom_call.1} parent=1 // pred_check_branch
      %14 = sbr.rel (0) target = $region9
    $region8: #{tpu_custom_call.1} parent=1 // pred_region
      _
    $region9: #{tpu_custom_call.1} parent=1 // pred_fallthru
      _
    // Predicated region
    $region10: #{tpu_custom_call.1} parent=1 // pred_check
      _
    $region11: #{tpu_custom_call.1} parent=1 // pred_check_branch
      %16 = sbr.rel (0) target = $region13
    $region12: #{tpu_custom_call.1} parent=1 // pred_region
      _
    $region13: #{tpu_custom_call.1} parent=1 // pred_fallthru
      _
    // Predicated region
    $region14: #{tpu_custom_call.1} parent=1 // pred_check
      _
    $region15: #{tpu_custom_call.1} parent=1 // pred_check_branch
      %18 = sbr.rel (0) target = $region17
    $region16: #{tpu_custom_call.1} parent=1 // pred_region
      _
    $region17: #{tpu_custom_call.1} parent=1 // pred_fallthru
      _
    // Predicated region
    $region18: #{tpu_custom_call.1} parent=1 // pred_check
      _
    $region19: #{tpu_custom_call.1} parent=1 // pred_check_branch
      %20 = sbr.rel (0) target = $region21
    $region20: #{tpu_custom_call.1} parent=1 // pred_region
      _
    $region21: #{tpu_custom_call.1} parent=1 // pred_fallthru
      _
    %v21 = vld [vmem:[%s0] sm:$0x3]
    %v22 = vld [vmem:[%s1] sm:$0xff]
    %v23 = vld [vmem:[%s1 + $0x8] sm:$0xff]
    %v24 = vld [vmem:[%s2] sm:$0xff]
    %v25 = vld [vmem:[%s2 + $0x8] sm:$0xff]
    %v26 = vld [vmem:[%s2 + $0x10] sm:$0xff]
    %v27 = vld [vmem:[%s2 + $0x18] sm:$0xff]
    %v28 = vld [vmem:[%s2 + $0x20] sm:$0xff]
    %v29 = vld [vmem:[%s2 + $0x28] sm:$0xff]
    %v30 = vld [vmem:[%s2 + $0x30] sm:$0xff]
    %v31 = vld [vmem:[%s2 + $0x38] sm:$0xff]
    %v32 = vld [vmem:[%s4] sm:$0x1]
    %v33 = vld [vmem:[%s4 + $0x1] sm:$0x1]
    %v34 = vld [vmem:[%s4 + $0x2] sm:$0x1]
    %v35 = vld [vmem:[%s4 + $0x3] sm:$0x1]
    %v36 = vlaneseq
    %v37 = vshrl.u32 %v36, 7
    %v38 = vsub.s32 0, %v37
    %v39 = vrot.slane %v32, %v38
    %vm40 = vcmask 261120
    %v42 = vsel %vm40, %v21, 0
    %44 = vmatprep.subr.mxu0 0.0
    %45 = vmatpush1.msra.mxu0 0.0
    %46 = vmatprep.subr.mxu0 0.0
    %47 = vmatpush1.msra.mxu0 0.0
    %48 = vmatprep.subr.mxu0 0.0
    %49 = vmatpush1.msra.mxu0 0.0
    %50 = vmatprep.subr.mxu0 0.0
    %51 = vmatpush1.msra.mxu0 0.0
    %52 = vmatprep.subr.mxu0 0.0
    %53 = vmatpush1.msra.mxu0 0.0
    %54 = vmatprep.subr.mxu0 0.0
    %55 = vmatpush1.msra.mxu0 0.0
    %56 = vmatprep.subr.mxu0 0.0
    %57 = vmatpush1.msra.mxu0 0.0
    %58 = vmatprep.subr.mxu0 0.0
    %59 = vmatpush1.msra.mxu0 0.0
    %60 = vmatprep.subr.mxu0 0.0
    %61 = vmatpush1.msra.mxu0 0.0
    %62 = vmatprep.subr.mxu0 0.0
    %63 = vmatpush1.msra.mxu0 0.0
    %64 = vmatprep.subr.mxu0 0.0
    %65 = vmatpush1.msra.mxu0 0.0
    %66 = vmatprep.subr.mxu0 0.0
    %67 = vmatpush1.msra.mxu0 0.0
    %68 = vmatprep.subr.mxu0 0.0
    %69 = vmatpush1.msra.mxu0 %v27
    %70 = vmatprep.subr.mxu0 0.0
    %71 = vmatpush1.msra.mxu0 %v26
    %72 = vmatprep.subr.mxu0 0.0
    %73 = vmatpush1.msra.mxu0 %v25
    %74 = vmatprep.subr.mxu0 0.0
    %75 = vmatpush1.msra.mxu0 %v24
    %76 = vmatprep.subr.mxu0 0.0
    %77 = vmatpush2.msra.mxu0 0.0
    %78 = vmatprep.subr.mxu0 0.0
    %79 = vmatpush2.msra.mxu0 0.0
    %80 = vmatprep.subr.mxu0 0.0
    %81 = vmatpush2.msra.mxu0 0.0
    %82 = vmatprep.subr.mxu0 0.0
    %83 = vmatpush2.msra.mxu0 0.0
    %84 = vmatprep.subr.mxu0 0.0
    %85 = vmatpush2.msra.mxu0 0.0
    %86 = vmatprep.subr.mxu0 0.0
    %87 = vmatpush2.msra.mxu0 0.0
    %88 = vmatprep.subr.mxu0 0.0
    %89 = vmatpush2.msra.mxu0 0.0
    %90 = vmatprep.subr.mxu0 0.0
    %91 = vmatpush2.msra.mxu0 0.0
    %92 = vmatprep.subr.mxu0 0.0
    %93 = vmatpush2.msra.mxu0 0.0
    %94 = vmatprep.subr.mxu0 0.0
    %95 = vmatpush2.msra.mxu0 0.0
    %96 = vmatprep.subr.mxu0 0.0
    %97 = vmatpush2.msra.mxu0 0.0
    %98 = vmatprep.subr.mxu0 0.0
    %99 = vmatpush2.msra.mxu0 0.0
    %100 = vmatprep.subr.mxu0 0.0
    %101 = vmatpush2.msra.mxu0 0.0
    %102 = vmatprep.subr.mxu0 0.0
    %103 = vmatpush2.msra.mxu0 0.0
    %104 = vmatprep.subr.mxu0 0.0
    %105 = vmatpush2.msra.mxu0 0.0
    %106 = vmatprep.subr.mxu0 0.0
    %107 = vmatpush2.msra.mxu0 0.0
    %108 = vmatprep.mubr.f32.mxu0 0.0
    %109 = vmatmul.mubr.f32.gmra.mxu0 %v42
    %v110 = vpop.f32.mrf.mxu0
    %v111 = vadd.f32 %v39, %v110
    %v112 = vpop.f32.mrf.mxu0
    %113 = vdwg.mxu0
    %v114 = vld [vmem:[%s3] sm:$0xff]
    %v115 = vld [vmem:[%s3 + $0x8] sm:$0xff]
    %v116 = vld [vmem:[%s3 + $0x10] sm:$0xff]
    %v117 = vld [vmem:[%s3 + $0x18] sm:$0xff]
    %v119 = vsel %vm40, %v22, 0
    %v122 = vsel %vm40, %v23, 0
    %124 = vmatprep.subr.mxu0 0.0
    %125 = vmatpush1.msra.mxu0 0.0
    %126 = vmatprep.subr.mxu0 0.0
    %127 = vmatpush1.msra.mxu0 0.0
    %128 = vmatprep.subr.mxu0 0.0
    %129 = vmatpush1.msra.mxu0 0.0
    %130 = vmatprep.subr.mxu0 0.0
    %131 = vmatpush1.msra.mxu0 0.0
    %132 = vmatprep.subr.mxu0 0.0
    %133 = vmatpush1.msra.mxu0 0.0
    %134 = vmatprep.subr.mxu0 0.0
    %135 = vmatpush1.msra.mxu0 0.0
    %136 = vmatprep.subr.mxu0 0.0
    %137 = vmatpush1.msra.mxu0 0.0
    %138 = vmatprep.subr.mxu0 0.0
    %139 = vmatpush1.msra.mxu0 0.0
    %140 = vmatprep.subr.mxu0 0.0
    %141 = vmatpush1.msra.mxu0 0.0
    %142 = vmatprep.subr.mxu0 0.0
    %143 = vmatpush1.msra.mxu0 0.0
    %144 = vmatprep.subr.mxu0 0.0
    %145 = vmatpush1.msra.mxu0 0.0
    %146 = vmatprep.subr.mxu0 0.0
    %147 = vmatpush1.msra.mxu0 0.0
    %148 = vmatprep.subr.mxu0 0.0
    %149 = vmatpush1.msra.mxu0 %v117
    %150 = vmatprep.subr.mxu0 0.0
    %151 = vmatpush1.msra.mxu0 %v116
    %152 = vmatprep.subr.mxu0 0.0
    %153 = vmatpush1.msra.mxu0 %v115
    %154 = vmatprep.subr.mxu0 0.0
    %155 = vmatpush1.msra.mxu0 %v114
    %156 = vmatprep.subr.mxu0 0.0
    %157 = vmatpush2.msra.mxu0 0.0
    %158 = vmatprep.subr.mxu0 0.0
    %159 = vmatpush2.msra.mxu0 0.0
    %160 = vmatprep.subr.mxu0 0.0
    %161 = vmatpush2.msra.mxu0 0.0
    %162 = vmatprep.subr.mxu0 0.0
    %163 = vmatpush2.msra.mxu0 0.0
    %164 = vmatprep.subr.mxu0 0.0
    %165 = vmatpush2.msra.mxu0 0.0
    %166 = vmatprep.subr.mxu0 0.0
    %167 = vmatpush2.msra.mxu0 0.0
    %168 = vmatprep.subr.mxu0 0.0
    %169 = vmatpush2.msra.mxu0 0.0
    %170 = vmatprep.subr.mxu0 0.0
    %171 = vmatpush2.msra.mxu0 0.0
    %172 = vmatprep.subr.mxu0 0.0
    %173 = vmatpush2.msra.mxu0 0.0
    %174 = vmatprep.subr.mxu0 0.0
    %175 = vmatpush2.msra.mxu0 0.0
    %176 = vmatprep.subr.mxu0 0.0
    %177 = vmatpush2.msra.mxu0 0.0
    %178 = vmatprep.subr.mxu0 0.0
    %179 = vmatpush2.msra.mxu0 0.0
    %180 = vmatprep.subr.mxu0 0.0
    %181 = vmatpush2.msra.mxu0 0.0
    %182 = vmatprep.subr.mxu0 0.0
    %183 = vmatpush2.msra.mxu0 0.0
    %184 = vmatprep.subr.mxu0 0.0
    %185 = vmatpush2.msra.mxu0 0.0
    %186 = vmatprep.subr.mxu0 0.0
    %187 = vmatpush2.msra.mxu0 0.0
    %188 = vmatprep.mubr.f32.mxu0 0.0
    %189 = vmatmul.mubr.f32.gmra.mxu0 %v119
    %v190 = vpop.f32.mrf.mxu0
    %v191 = vadd.f32 0.0, %v190
    %v192 = vpop.f32.mrf.mxu0
    %193 = vmatprep.mubr.f32.mxu0 0.0
    %194 = vmatmul.mubr.f32.gmra.mxu0 %v122
    %v195 = vpop.f32.mrf.mxu0
    %v196 = vadd.f32 0.0, %v195
    %v197 = vpop.f32.mrf.mxu0
    %198 = vdwg.mxu0
    %v199 = vlaneseq
    %v200 = vshrl.u32 %v199, 7
    %v201 = vsub.s32 0, %v200
    %v202 = vrot.slane %v33, %v201
    %v203 = vadd.f32 %v191, %v202
    %v204 = vadd.f32 %v196, %v202
    %v205 = vlaneseq
    %v206 = vshrl.u32 %v205, 7
    %v207 = vsub.s32 0, %v206
    %v208 = vrot.slane %v34, %v207
    %210 = vrot.lane.b32.xlu0 %v208, 32
    %v211 = vpop.permute.xlu0 %210
    %v213 = vadd.f32 %v191, %v211
    %v214 = vadd.f32 %v196, %v211
    %v217 = vunpack.c.l.s4 1966171168
    %v218 = vunpack.c.0.s8 %v217
    %v219 = vlaneseq
    %v220 = vshrl.u32 %v219, 7
    %v221 = vsub.s32 %v218, %v220
    %v222 = vrot.slane %v111, %v221
    %v223 = vcombine.high %v222, %v222
    %v225 = vunpack.c.l.s4 1966171168
    %v226 = vunpack.c.0.s8 %v225
    %v227 = vlaneseq
    %v228 = vshrl.u32 %v227, 7
    %v229 = vsub.s32 %v226, %v228
    %v230 = vrot.slane %v222, %v229
    %v232 = vunpack.c.l.s4 1966171168
    %v233 = vunpack.c.0.s8 %v232
    %v234 = vlaneseq
    %v235 = vshrl.u32 %v234, 7
    %v236 = vsub.s32 %v233, %v235
    %v237 = vrot.slane %v223, %v236
    %v238 = vlaneseq
    %v239 = vshrl.u32 %v238, 7
    %v240 = vsub.s32 0, %v239
    %v241 = vrot.slane %v230, %v240
    %v242 = vlaneseq
    %v243 = vshrl.u32 %v242, 7
    %v244 = vsub.s32 0, %v243
    %v245 = vrot.slane %v237, %v244
    %v248 = vmul.f32 %v241, %v203
    %v249 = vmul.f32 %v245, %v204
    %vm250 = vcmask 64512
    %v251 = vsel %vm250, %v248, 0.0
    %252 = vadd.xlane.f32.xlu0 %v251
    %v253 = vpop.xlane.xlu0 %252
    %v254 = vsel %vm250, %v249, 0.0
    %255 = vadd.xlane.f32.xlu0 %v254
    %v256 = vpop.xlane.xlu0 %255
    %v257 = vmul.f32 %v253, 0.35355338
    %v258 = vmul.f32 %v256, 0.35355338
    %v259 = vrot.slane %v257, 4
    %v260 = vmax.f32 %v257, %v259
    %v261 = vrot.slane %v260, 2
    %v262 = vmax.f32 %v260, %v261
    %v263 = vrot.slane %v262, 1
    %v264 = vmax.f32 %v262, %v263
    %v265 = vrot.slane %v258, 4
    %v266 = vmax.f32 %v258, %v265
    %v267 = vrot.slane %v266, 2
    %v268 = vmax.f32 %v266, %v267
    %v269 = vrot.slane %v268, 1
    %v270 = vmax.f32 %v268, %v269
    %v271 = vsub.f32 %v257, %v264
    %v272 = vsub.f32 %v258, %v270
    %v273 = vmul.f32 %v271, 1.442695
    %v274 = vpow.pop %v273
    %v275 = vmul.f32 %v272, 1.442695
    %v276 = vpow.pop %v275
    %v277 = vrot.slane %v274, 4
    %v278 = vadd.f32 %v274, %v277
    %v279 = vrot.slane %v278, 2
    %v280 = vadd.f32 %v278, %v279
    %v281 = vrot.slane %v280, 1
    %v282 = vadd.f32 %v280, %v281
    %v283 = vrot.slane %v276, 4
    %v284 = vadd.f32 %v276, %v283
    %v285 = vrot.slane %v284, 2
    %v286 = vadd.f32 %v284, %v285
    %v287 = vrot.slane %v286, 1
    %v288 = vadd.f32 %v286, %v287
    %v289 = vrcp.pop %v282
    %v290 = vmul.f32 %v274, %v289
    %v291 = vrcp.pop %v288
    %v292 = vmul.f32 %v276, %v291
    %v293 = vmul.f32 %v290, %v213
    %v294 = vmul.f32 %v292, %v214
    %vm295 = vcmask 326912
    %v296 = vsel %vm295, %v293, 0.0
    %v297 = vrot.slane %v296, 4
    %v298 = vadd.f32 %v296, %v297
    %v299 = vrot.slane %v298, 2
    %v300 = vadd.f32 %v298, %v299
    %v301 = vrot.slane %v300, 1
    %v302 = vadd.f32 %v300, %v301
    %v303 = vsel %vm295, %v294, 0.0
    %v304 = vrot.slane %v303, 4
    %v305 = vadd.f32 %v303, %v304
    %v306 = vrot.slane %v305, 2
    %v307 = vadd.f32 %v305, %v306
    %v308 = vrot.slane %v307, 1
    %v309 = vadd.f32 %v307, %v308
    %312 = vrot.lane.b32.xlu0 %v248, 120
    %v313 = vpop.permute.xlu0 %312
    %314 = vrot.lane.b32.xlu0 %v249, 120
    %v315 = vpop.permute.xlu0 %314
    %v318 = vsel %vm250, %v313, 0.0
    %319 = vadd.xlane.f32.xlu0 %v318
    %v320 = vpop.xlane.xlu0 %319
    %v321 = vsel %vm250, %v315, 0.0
    %322 = vadd.xlane.f32.xlu0 %v321
    %v323 = vpop.xlane.xlu0 %322
    %v324 = vmul.f32 %v320, 0.35355338
    %v325 = vmul.f32 %v323, 0.35355338
    %v326 = vrot.slane %v324, 4
    %v327 = vmax.f32 %v324, %v326
    %v328 = vrot.slane %v327, 2
    %v329 = vmax.f32 %v327, %v328
    %v330 = vrot.slane %v329, 1
    %v331 = vmax.f32 %v329, %v330
    %v332 = vrot.slane %v325, 4
    %v333 = vmax.f32 %v325, %v332
    %v334 = vrot.slane %v333, 2
    %v335 = vmax.f32 %v333, %v334
    %v336 = vrot.slane %v335, 1
    %v337 = vmax.f32 %v335, %v336
    %v338 = vsub.f32 %v324, %v331
    %v339 = vsub.f32 %v325, %v337
    %v340 = vmul.f32 %v338, 1.442695
    %v341 = vpow.pop %v340
    %v342 = vmul.f32 %v339, 1.442695
    %v343 = vpow.pop %v342
    %v344 = vrot.slane %v341, 4
    %v345 = vadd.f32 %v341, %v344
    %v346 = vrot.slane %v345, 2
    %v347 = vadd.f32 %v345, %v346
    %v348 = vrot.slane %v347, 1
    %v349 = vadd.f32 %v347, %v348
    %v350 = vrot.slane %v343, 4
    %v351 = vadd.f32 %v343, %v350
    %v352 = vrot.slane %v351, 2
    %v353 = vadd.f32 %v351, %v352
    %v354 = vrot.slane %v353, 1
    %v355 = vadd.f32 %v353, %v354
    %v356 = vrcp.pop %v349
    %v357 = vmul.f32 %v341, %v356
    %v358 = vrcp.pop %v355
    %v359 = vmul.f32 %v343, %v358
    %v360 = vmul.f32 %v357, %v213
    %v361 = vmul.f32 %v359, %v214
    %vm362 = vcmask 392512
    %v363 = vsel %vm362, %v360, 0.0
    %v364 = vrot.slane %v363, 4
    %v365 = vadd.f32 %v363, %v364
    %v366 = vrot.slane %v365, 2
    %v367 = vadd.f32 %v365, %v366
    %v368 = vrot.slane %v367, 1
    %v369 = vadd.f32 %v367, %v368
    %v370 = vsel %vm362, %v361, 0.0
    %v371 = vrot.slane %v370, 4
    %v372 = vadd.f32 %v370, %v371
    %v373 = vrot.slane %v372, 2
    %v374 = vadd.f32 %v372, %v373
    %v375 = vrot.slane %v374, 1
    %v376 = vadd.f32 %v374, %v375
    %377 = vrot.lane.b32.xlu0 %v248, 112
    %v378 = vpop.permute.xlu0 %377
    %379 = vrot.lane.b32.xlu0 %v249, 112
    %v380 = vpop.permute.xlu0 %379
    %v383 = vsel %vm250, %v378, 0.0
    %384 = vadd.xlane.f32.xlu0 %v383
    %v385 = vpop.xlane.xlu0 %384
    %v386 = vsel %vm250, %v380, 0.0
    %387 = vadd.xlane.f32.xlu0 %v386
    %v388 = vpop.xlane.xlu0 %387
    %v389 = vmul.f32 %v385, 0.35355338
    %v390 = vmul.f32 %v388, 0.35355338
    %v391 = vrot.slane %v389, 4
    %v392 = vmax.f32 %v389, %v391
    %v393 = vrot.slane %v392, 2
    %v394 = vmax.f32 %v392, %v393
    %v395 = vrot.slane %v394, 1
    %v396 = vmax.f32 %v394, %v395
    %v397 = vrot.slane %v390, 4
    %v398 = vmax.f32 %v390, %v397
    %v399 = vrot.slane %v398, 2
    %v400 = vmax.f32 %v398, %v399
    %v401 = vrot.slane %v400, 1
    %v402 = vmax.f32 %v400, %v401
    %v403 = vsub.f32 %v389, %v396
    %v404 = vsub.f32 %v390, %v402
    %v405 = vmul.f32 %v403, 1.442695
    %v406 = vpow.pop %v405
    %v407 = vmul.f32 %v404, 1.442695
    %v408 = vpow.pop %v407
    %v409 = vrot.slane %v406, 4
    %v410 = vadd.f32 %v406, %v409
    %v411 = vrot.slane %v410, 2
    %v412 = vadd.f32 %v410, %v411
    %v413 = vrot.slane %v412, 1
    %v414 = vadd.f32 %v412, %v413
    %v415 = vrot.slane %v408, 4
    %v416 = vadd.f32 %v408, %v415
    %v417 = vrot.slane %v416, 2
    %v418 = vadd.f32 %v416, %v417
    %v419 = vrot.slane %v418, 1
    %v420 = vadd.f32 %v418, %v419
    %v421 = vrcp.pop %v414
    %v422 = vmul.f32 %v406, %v421
    %v423 = vrcp.pop %v420
    %v424 = vmul.f32 %v408, %v423
    %v425 = vmul.f32 %v422, %v213
    %v426 = vmul.f32 %v424, %v214
    %vm427 = vcmask 458112
    %v428 = vsel %vm427, %v425, 0.0
    %v429 = vrot.slane %v428, 4
    %v430 = vadd.f32 %v428, %v429
    %v431 = vrot.slane %v430, 2
    %v432 = vadd.f32 %v430, %v431
    %v433 = vrot.slane %v432, 1
    %v434 = vadd.f32 %v432, %v433
    %v435 = vsel %vm427, %v426, 0.0
    %v436 = vrot.slane %v435, 4
    %v437 = vadd.f32 %v435, %v436
    %v438 = vrot.slane %v437, 2
    %v439 = vadd.f32 %v437, %v438
    %v440 = vrot.slane %v439, 1
    %v441 = vadd.f32 %v439, %v440
    %442 = vrot.lane.b32.xlu0 %v248, 104
    %v443 = vpop.permute.xlu0 %442
    %444 = vrot.lane.b32.xlu0 %v249, 104
    %v445 = vpop.permute.xlu0 %444
    %v448 = vsel %vm250, %v443, 0.0
    %449 = vadd.xlane.f32.xlu0 %v448
    %v450 = vpop.xlane.xlu0 %449
    %v451 = vsel %vm250, %v445, 0.0
    %452 = vadd.xlane.f32.xlu0 %v451
    %v453 = vpop.xlane.xlu0 %452
    %v454 = vmul.f32 %v450, 0.35355338
    %v455 = vmul.f32 %v453, 0.35355338
    %v456 = vrot.slane %v454, 4
    %v457 = vmax.f32 %v454, %v456
    %v458 = vrot.slane %v457, 2
    %v459 = vmax.f32 %v457, %v458
    %v460 = vrot.slane %v459, 1
    %v461 = vmax.f32 %v459, %v460
    %v462 = vrot.slane %v455, 4
    %v463 = vmax.f32 %v455, %v462
    %v464 = vrot.slane %v463, 2
    %v465 = vmax.f32 %v463, %v464
    %v466 = vrot.slane %v465, 1
    %v467 = vmax.f32 %v465, %v466
    %v468 = vsub.f32 %v454, %v461
    %v469 = vsub.f32 %v455, %v467
    %v470 = vmul.f32 %v468, 1.442695
    %v471 = vpow.pop %v470
    %v472 = vmul.f32 %v469, 1.442695
    %v473 = vpow.pop %v472
    %v474 = vrot.slane %v471, 4
    %v475 = vadd.f32 %v471, %v474
    %v476 = vrot.slane %v475, 2
    %v477 = vadd.f32 %v475, %v476
    %v478 = vrot.slane %v477, 1
    %v479 = vadd.f32 %v477, %v478
    %v480 = vrot.slane %v473, 4
    %v481 = vadd.f32 %v473, %v480
    %v482 = vrot.slane %v481, 2
    %v483 = vadd.f32 %v481, %v482
    %v484 = vrot.slane %v483, 1
    %v485 = vadd.f32 %v483, %v484
    %v486 = vrcp.pop %v479
    %v487 = vmul.f32 %v471, %v486
    %v488 = vrcp.pop %v485
    %v489 = vmul.f32 %v473, %v488
    %v490 = vmul.f32 %v487, %v213
    %v491 = vmul.f32 %v489, %v214
    %vm492 = vcmask 523712
    %v493 = vsel %vm492, %v490, 0.0
    %v494 = vrot.slane %v493, 4
    %v495 = vadd.f32 %v493, %v494
    %v496 = vrot.slane %v495, 2
    %v497 = vadd.f32 %v495, %v496
    %v498 = vrot.slane %v497, 1
    %v499 = vadd.f32 %v497, %v498
    %v500 = vsel %vm492, %v491, 0.0
    %v501 = vrot.slane %v500, 4
    %v502 = vadd.f32 %v500, %v501
    %v503 = vrot.slane %v502, 2
    %v504 = vadd.f32 %v502, %v503
    %v505 = vrot.slane %v504, 1
    %v506 = vadd.f32 %v504, %v505
    %vm509 = vcmask 1041409
    %v510 = vsel %vm509, %v309, %v302
    %511 = vrot.lane.b32.xlu0 %v510, 96
    %v512 = vpop.permute.xlu0 %511
    %v516 = vsel %vm509, %v376, %v369
    %517 = vrot.lane.b32.xlu0 %v516, 96
    %v518 = vpop.permute.xlu0 %517
    %v522 = vsel %vm509, %v441, %v434
    %523 = vrot.lane.b32.xlu0 %v522, 96
    %v524 = vpop.permute.xlu0 %523
    %v528 = vsel %vm509, %v506, %v499
    %529 = vrot.lane.b32.xlu0 %v528, 96
    %v530 = vpop.permute.xlu0 %529
    %v532 = vsel %vm250, %v512, %v518
    %vm533 = vcmask 130048
    %v534 = vsel %vm533, %v532, %v524
    %vm535 = vcmask 195584
    %v536 = vsel %vm535, %v534, %v530
    %v537 = vlaneseq
    %v538 = vshrl.u32 %v537, 7
    %v539 = vsub.s32 0, %v538
    %v540 = vrot.slane %v35, %v539
    %v542 = vsel %vm40, %v536, 0
    %544 = vmatprep.subr.mxu0 0.0
    %545 = vmatpush1.msra.mxu0 0.0
    %546 = vmatprep.subr.mxu0 0.0
    %547 = vmatpush1.msra.mxu0 0.0
    %548 = vmatprep.subr.mxu0 0.0
    %549 = vmatpush1.msra.mxu0 0.0
    %550 = vmatprep.subr.mxu0 0.0
    %551 = vmatpush1.msra.mxu0 0.0
    %552 = vmatprep.subr.mxu0 0.0
    %553 = vmatpush1.msra.mxu0 0.0
    %554 = vmatprep.subr.mxu0 0.0
    %555 = vmatpush1.msra.mxu0 0.0
    %556 = vmatprep.subr.mxu0 0.0
    %557 = vmatpush1.msra.mxu0 0.0
    %558 = vmatprep.subr.mxu0 0.0
    %559 = vmatpush1.msra.mxu0 0.0
    %560 = vmatprep.subr.mxu0 0.0
    %561 = vmatpush1.msra.mxu0 0.0
    %562 = vmatprep.subr.mxu0 0.0
    %563 = vmatpush1.msra.mxu0 0.0
    %564 = vmatprep.subr.mxu0 0.0
    %565 = vmatpush1.msra.mxu0 0.0
    %566 = vmatprep.subr.mxu0 0.0
    %567 = vmatpush1.msra.mxu0 0.0
    %568 = vmatprep.subr.mxu0 0.0
    %569 = vmatpush1.msra.mxu0 %v31
    %570 = vmatprep.subr.mxu0 0.0
    %571 = vmatpush1.msra.mxu0 %v30
    %572 = vmatprep.subr.mxu0 0.0
    %573 = vmatpush1.msra.mxu0 %v29
    %574 = vmatprep.subr.mxu0 0.0
    %575 = vmatpush1.msra.mxu0 %v28
    %576 = vmatprep.subr.mxu0 0.0
    %577 = vmatpush2.msra.mxu0 0.0
    %578 = vmatprep.subr.mxu0 0.0
    %579 = vmatpush2.msra.mxu0 0.0
    %580 = vmatprep.subr.mxu0 0.0
    %581 = vmatpush2.msra.mxu0 0.0
    %582 = vmatprep.subr.mxu0 0.0
    %583 = vmatpush2.msra.mxu0 0.0
    %584 = vmatprep.subr.mxu0 0.0
    %585 = vmatpush2.msra.mxu0 0.0
    %586 = vmatprep.subr.mxu0 0.0
    %587 = vmatpush2.msra.mxu0 0.0
    %588 = vmatprep.subr.mxu0 0.0
    %589 = vmatpush2.msra.mxu0 0.0
    %590 = vmatprep.subr.mxu0 0.0
    %591 = vmatpush2.msra.mxu0 0.0
    %592 = vmatprep.subr.mxu0 0.0
    %593 = vmatpush2.msra.mxu0 0.0
    %594 = vmatprep.subr.mxu0 0.0
    %595 = vmatpush2.msra.mxu0 0.0
    %596 = vmatprep.subr.mxu0 0.0
    %597 = vmatpush2.msra.mxu0 0.0
    %598 = vmatprep.subr.mxu0 0.0
    %599 = vmatpush2.msra.mxu0 0.0
    %600 = vmatprep.subr.mxu0 0.0
    %601 = vmatpush2.msra.mxu0 0.0
    %602 = vmatprep.subr.mxu0 0.0
    %603 = vmatpush2.msra.mxu0 0.0
    %604 = vmatprep.subr.mxu0 0.0
    %605 = vmatpush2.msra.mxu0 0.0
    %606 = vmatprep.subr.mxu0 0.0
    %607 = vmatpush2.msra.mxu0 0.0
    %608 = vmatprep.mubr.f32.mxu0 0.0
    %609 = vmatmul.mubr.f32.gmra.mxu0 %v542
    %v610 = vpop.f32.mrf.mxu0
    %v611 = vadd.f32 %v540, %v610
    %v612 = vpop.f32.mrf.mxu0
    %613 = vdwg.mxu0
    %v614 = vmul.f32 %v611, %v611
    %vm615 = vcmask 254976
    %v616 = vsel %vm615, %v614, 0.0
    %617 = vadd.xlane.f32.xlu0 %v616
    %v618 = vpop.xlane.xlu0 %617
    %v619 = vmax.f32 %v618, 1e-24
    %v620 = vrsqrt.pop %v619
    %v621 = vmul.f32 %v611, %v620
    %622 = vst.msk [vmem:[#allocation2] sm:$0x3] %vm615, %v621
    // Predicated region
    $region22: #{tpu_custom_call.1} parent=1 // pred_check
      _
    $region23: #{tpu_custom_call.1} parent=1 // pred_check_branch
      %624 = sbr.rel (0) target = $region25
    $region24: #{tpu_custom_call.1} parent=1 // pred_region
      %s626 = ssub.s32 32, 32
      %627 = vsyncadd [#allocation3], %s626
      %s629 = sshll.u32 [#allocation2], 4
      %s630 = int_to_ptr.vmem [resolvable:$true] %s629
      %632 = dma.vmem_to_hbm [thread:$0]  %s630, 32, %s5, [#allocation3]
    $region25: #{tpu_custom_call.1} parent=1 // pred_fallthru
      _
    // Predicated region
    $region26: #{tpu_custom_call.1} parent=1 // pred_check
      _
    $region27: #{tpu_custom_call.1} parent=1 // pred_check_branch
      %634 = sbr.rel (0) target = $region29
    $region28: #{tpu_custom_call.1} parent=1 // pred_region
      %635 = dma.done [#allocation3], 32
    $region29: #{tpu_custom_call.1} parent=1 // pred_fallthru
      _
    %636 = vsyncpa [#allocation3], 1

</llo_original>
